<compile_context>
chip_gen: v7x
topology: tpu7x:2x2x1
jax: 0.10.0
libtpu: 0.0.40
codegen_flags: <defaults>
</compile_context>

<pallas_src>
import jax
import jax.numpy as jnp
from jax.experimental import pallas as pl
from jax.experimental.pallas import tpu as pltpu


LANE_COLS = 512        # slab width; multiple of 128 -> full-width, unmasked vst
MAX_BLOCK_ROWS = 1024  # up to (1024, 512) f32 = 2 MiB per tile


def _ceil_div(a, b):
    return -(-a // b)


def _round_up(a, m):
    return _ceil_div(a, m) * m


def _round_down(a, m):
    return (a // m) * m


def ndecoder_kernel(wb_ref, x_ref, scale_ref):
    # wb_ref: (2,) in SMEM  -- [weight, bias] of the Linear(1,1)
    # x_ref / scale_ref: (block_rows, LANE_COLS) tiles in VMEM
    w = wb_ref[0]
    b = wb_ref[1]
    logscale = x_ref[...].astype(jnp.float32) * w + b   # Linear(1,1) (VPU)
    scale_ref[...] = jnp.exp(logscale)                   # pnx_scale (EUP exp)


def _pick_block_rows(rows):
    """Row-block that is a multiple of 8 (or equal to rows), <= MAX_BLOCK_ROWS,
    aiming for >= 2 grid steps so both TensorCores are used on v7x."""
    target = _ceil_div(rows, 2)
    block_rows = min(MAX_BLOCK_ROWS, _round_up(target, 8))
    block_rows = min(block_rows, rows)
    if block_rows != rows:
        block_rows = max(8, _round_down(block_rows, 8))
    return block_rows


def ndecoder_forward(x, w, b):
    """x: (B, 1); w: (1, 1); b: (1,). Returns (pnx_mean, pnx_scale)."""
    B, F = x.shape
    assert F == 1, "NDecoder operates on a single feature (Linear(1,1))"

    # pnx_mean is the identity: return the input directly, no kernel work.
    pnx_mean = x

    # Pack Linear(1,1) params into one tiny SMEM array.
    wb = jnp.concatenate([w.reshape(-1), b.reshape(-1)]).astype(jnp.float32)

    # Lane-dense slab (rows, LANE_COLS). Pad only when B is not a multiple of
    # LANE_COLS (at most LANE_COLS-1 extra elements).
    rows = _ceil_div(B, LANE_COLS)
    padded = rows * LANE_COLS
    flat = x.reshape(-1).astype(jnp.float32)
    if padded != B:
        # Padded elements compute exp(b); they are sliced off below and any
        # future reduction over the slab must happen after that slice.
        flat = jnp.pad(flat, (0, padded - B))
    slab = flat.reshape(rows, LANE_COLS)

    block_rows = _pick_block_rows(rows)
    grid = _ceil_div(rows, block_rows)

    scale_slab = pl.pallas_call(
        ndecoder_kernel,
        out_shape=jax.ShapeDtypeStruct((rows, LANE_COLS), jnp.float32),
        grid=(grid,),
        in_specs=[
            pl.BlockSpec(memory_space=pltpu.SMEM),                     # [w, b]
            pl.BlockSpec((block_rows, LANE_COLS), lambda i: (i, 0)),   # x slab
        ],
        out_specs=pl.BlockSpec((block_rows, LANE_COLS), lambda i: (i, 0)),
        compiler_params=pltpu.CompilerParams(
            dimension_semantics=("parallel",),
        ),
    )(wb, slab)

    if padded != B:
        pnx_scale = scale_slab.reshape(-1)[:B].reshape(B, 1)
    else:
        pnx_scale = scale_slab.reshape(B, 1)   # free reshape, no copy
    return pnx_mean, pnx_scale


if __name__ == "__main__":
    key = jax.random.PRNGKey(0)
    kx1, kx2, kw, kb = jax.random.split(key, 4)

    # Deterministic Linear(1,1) parameters.
    w = jax.random.uniform(kw, (1, 1), dtype=jnp.float32, minval=-1.0, maxval=1.0)
    b = jax.random.uniform(kb, (1,), dtype=jnp.float32, minval=-1.0, maxval=1.0)

    def reference(xv):
        return xv, jnp.exp(xv @ w.T + b)

    # Case 1: B a multiple of LANE_COLS -> zero-copy path (no pad, no slice).
    B1 = 2048
    x1 = jax.random.normal(kx1, (B1, 1), dtype=jnp.float32)
    mean1, scale1 = jax.block_until_ready(ndecoder_forward(x1, w, b))
    ref_m1, ref_s1 = reference(x1)
    assert mean1.shape == (B1, 1) and scale1.shape == (B1, 1)
    assert jnp.allclose(mean1, ref_m1)
    assert jnp.allclose(scale1, ref_s1, rtol=1e-6, atol=1e-6)

    # Case 2: ragged B -> pads only to the next multiple of LANE_COLS.
    B2 = 100
    x2 = jax.random.normal(kx2, (B2, 1), dtype=jnp.float32)
    mean2, scale2 = jax.block_until_ready(ndecoder_forward(x2, w, b))
    ref_m2, ref_s2 = reference(x2)
    assert mean2.shape == (B2, 1) and scale2.shape == (B2, 1)
    assert jnp.allclose(mean2, ref_m2)
    assert jnp.allclose(scale2, ref_s2, rtol=1e-6, atol=1e-6)

    print("KERNEL_OK")
</pallas_src>

<mosaic_0001>
module attributes {stable_mosaic.version = 11 : i64} {
  func.func @ndecoder_kernel(%arg0: i32, %arg1: memref<2xf32, #tpu.memory_space<smem>>, %arg2: memref<4x512xf32, #tpu.memory_space<vmem>>, %arg3: memref<4x512xf32, #tpu.memory_space<vmem>>) attributes {dimension_semantics = [#tpu.dimension_semantics<parallel>], iteration_bounds = array<i64: 1>, scalar_prefetch = 0 : i64, scratch_operands = 0 : i64, tpu.core_type = #tpu.core_type<tc>, window_params = [{transform_indices = @transform_0, window_bounds = array<i64: 2>}, {transform_indices = @transform_1, window_bounds = array<i64: 4, 512>}, {transform_indices = @transform_2, window_bounds = array<i64: 4, 512>}]} {
    %c0 = arith.constant 0 : index
    %0 = memref.load %arg1[%c0] : memref<2xf32, #tpu.memory_space<smem>>
    %c1 = arith.constant 1 : index
    %1 = memref.load %arg1[%c1] : memref<2xf32, #tpu.memory_space<smem>>
    %c0_0 = arith.constant 0 : index
    %c0_1 = arith.constant 0 : index
    %2 = vector.load %arg2[%c0_0, %c0_1] : memref<4x512xf32, #tpu.memory_space<vmem>>, vector<4x512xf32>
    %3 = vector.broadcast %0 : f32 to vector<4x512xf32>
    %4 = arith.mulf %2, %3 : vector<4x512xf32>
    %5 = vector.broadcast %1 : f32 to vector<4x512xf32>
    %6 = arith.addf %4, %5 : vector<4x512xf32>
    %7 = math.exp %6 : vector<4x512xf32>
    %c0_2 = arith.constant 0 : index
    %c0_3 = arith.constant 0 : index
    %8 = vector.load %arg3[%c0_2, %c0_3] : memref<4x512xf32, #tpu.memory_space<vmem>>, vector<4x512xf32>
    tpu.vector_store %arg3[%c0_2, %c0_3], %7 {strides = array<i32>} : memref<4x512xf32, #tpu.memory_space<vmem>>, vector<4x512xf32>,
    return
  }
  func.func @transform_0(%arg0: i32) -> i32 {
    %c0_i32 = arith.constant 0 : i32
    %c0_i32_0 = arith.constant 0 : i32
    return %c0_i32 : i32
  }
  func.func @transform_1(%arg0: i32) -> (i32, i32) {
    %c0_i32 = arith.constant 0 : i32
    %c0_i32_0 = arith.constant 0 : i32
    return %arg0, %c0_i32 : i32, i32
  }
  func.func @transform_2(%arg0: i32) -> (i32, i32) {
    %c0_i32 = arith.constant 0 : i32
    %c0_i32_0 = arith.constant 0 : i32
    return %arg0, %c0_i32 : i32, i32
  }
}

</mosaic_0001>

<llo_original>
// kernel: tpu_custom_call.1
$region0: #{tpu_custom_call.1}
  #allocation0 [shape = 'u32[]', space=smem, size = 0x4, offset = 0x4, fixed_abs, tag = 'smem constant byte address 0x4 - core index']
  #allocation1 [shape = 'u32[144,128]{1,0:T(1,128)}', space=vmem, size = 0x12000, scoped, tag = 'internal scratch']
  %s0 = inlined_call_operand.hbm [shape: f32[2], index: 0, kind: input, shape index: {}]
  %s1 = inlined_call_operand.hbm [shape: f32[4,512], index: 1, kind: input, shape index: {}]
  %s2 = inlined_call_operand.hbm [shape: f32[4,512], index: 2, kind: output, shape index: {}]
  %s3 = sld [smem:[#allocation0]]
  $region26: #{tpu_custom_call.1} parent=0
    _
  %s5 = ssub.s32 1, %s3
  %s6 = scalar_select 0, %s5, %s3
  $region1: #{tpu_custom_call.1} parent=0
    #allocation2 [shape = 'u8[512]{0}', space=smem, size = 0x200, scoped, tag = 'input window, operand 0, single buffered']
    #allocation3 [shape = 's32[1]{0}', space=sflag, size = 0x4, scoped, tag = 'scoped memory for tpu_custom_call.1']
    #allocation4 [shape = 's32[1]{0}', space=sflag, size = 0x4, scoped, tag = 'scoped memory for tpu_custom_call.1']
    #allocation5 [shape = 's32[1]{0}', space=sflag, size = 0x4, scoped, tag = 'scoped memory for tpu_custom_call.1']
    #allocation6 [shape = 'u8[8192]{0}', space=vmem, size = 0x2000, scoped, tag = 'input window, operand 1, single buffered']
    #allocation7 [shape = 'u8[8192]{0}', space=vmem, size = 0x2000, scoped, tag = 'output window, operand 0, single buffered']
    %7 = vsyncpa [#allocation5], 0
    %8 = vsyncpa [#allocation3], 0
    %9 = vsyncpa [#allocation4], 0
    // Predicated region
    $region2: #{tpu_custom_call.1} parent=1 // pred_check
      _
    $region3: #{tpu_custom_call.1} parent=1 // pred_check_branch
      %11 = sbr.rel (0) target = $region5
    $region4: #{tpu_custom_call.1} parent=1 // pred_region
      %s13 = ssub.s32 16, 16
      %14 = vsyncadd [#allocation5], %s13
      %17 = dma.hbm_to_smem %s0, 16, [#allocation2], [#allocation5]
    $region5: #{tpu_custom_call.1} parent=1 // pred_fallthru
      _
    // Predicated region
    $region6: #{tpu_custom_call.1} parent=1 // pred_check
      _
    $region7: #{tpu_custom_call.1} parent=1 // pred_check_branch
      %19 = sbr.rel (0) target = $region9
    $region8: #{tpu_custom_call.1} parent=1 // pred_region
      %s21 = ssub.s32 256, 256
      %22 = vsyncadd [#allocation3], %s21
      %s24 = sshll.u32 [#allocation6], 4
      %s25 = int_to_ptr.vmem [resolvable:$true] %s24
      %27 = dma.hbm_to_vmem [thread:$0]  %s1, 256, %s25, [#allocation3]
    $region9: #{tpu_custom_call.1} parent=1 // pred_fallthru
      _
    // Predicated region
    $region10: #{tpu_custom_call.1} parent=1 // pred_check
      _
    $region11: #{tpu_custom_call.1} parent=1 // pred_check_branch
      %29 = sbr.rel (0) target = $region13
    $region12: #{tpu_custom_call.1} parent=1 // pred_region
      %30 = dma.done [#allocation5], 16
    $region13: #{tpu_custom_call.1} parent=1 // pred_fallthru
      _
    // Predicated region
    $region14: #{tpu_custom_call.1} parent=1 // pred_check
      _
    $region15: #{tpu_custom_call.1} parent=1 // pred_check_branch
      %32 = sbr.rel (0) target = $region17
    $region16: #{tpu_custom_call.1} parent=1 // pred_region
      %33 = dma.done [#allocation3], 256
    $region17: #{tpu_custom_call.1} parent=1 // pred_fallthru
      _
    %34 = sfence
    %s35 = sld [smem:[#allocation2]]
    %s36 = sld [smem:[#allocation2 + $0x1]]
    %v37 = vld [vmem:[#allocation6] sm:$0xff]
    %v38 = vld [vmem:[#allocation6 + $0x8] sm:$0xff]
    %v39 = vstv %s35
    %v40 = vmul.f32 %v37, %v39
    %v41 = vmul.f32 %v38, %v39
    %v42 = vstv %s36
    %v43 = vadd.f32 %v40, %v42
    %v44 = vadd.f32 %v41, %v42
    %v45 = vmul.f32 %v43, 1.442695
    %v46 = vpow.pop %v45
    %v47 = vmul.f32 %v44, 1.442695
    %v48 = vpow.pop %v47
    %49 = vst [vmem:[#allocation7] sm:$0xff] %v46
    %50 = vst [vmem:[#allocation7 + $0x8] sm:$0xff] %v48
    // Predicated region
    $region18: #{tpu_custom_call.1} parent=1 // pred_check
      _
    $region19: #{tpu_custom_call.1} parent=1 // pred_check_branch
      %52 = sbr.rel (0) target = $region21
    $region20: #{tpu_custom_call.1} parent=1 // pred_region
      %s54 = ssub.s32 256, 256
      %55 = vsyncadd [#allocation4], %s54
      %s57 = sshll.u32 [#allocation7], 4
      %s58 = int_to_ptr.vmem [resolvable:$true] %s57
      %60 = dma.vmem_to_hbm [thread:$0]  %s58, 256, %s2, [#allocation4]
    $region21: #{tpu_custom_call.1} parent=1 // pred_fallthru
      _
    // Predicated region
    $region22: #{tpu_custom_call.1} parent=1 // pred_check
      _
    $region23: #{tpu_custom_call.1} parent=1 // pred_check_branch
      %62 = sbr.rel (0) target = $region25
    $region24: #{tpu_custom_call.1} parent=1 // pred_region
      %63 = dma.done [#allocation4], 256
    $region25: #{tpu_custom_call.1} parent=1 // pred_fallthru
      _
    %64 = vsyncpa [#allocation3], 1
    %65 = vsyncpa [#allocation4], 1
    %66 = vsyncpa [#allocation5], 1

</llo_original>
